<compile_context>
chip_gen: v6e
topology: v6e:2x2x1
jax: 0.10.0
libtpu: 0.0.40
codegen_flags: <defaults>
</compile_context>

<pallas_src>
import functools

import jax
import jax.numpy as jnp
from jax.experimental import pallas as pl
from jax.experimental.pallas import tpu as pltpu


def _round_up(x, m):
    return ((x + m - 1) // m) * m


def _chip_defaults():
    """Return (num_cores, tile_rows, vmem_limit_bytes) for the local TPU."""
    try:
        kind = jax.devices()[0].device_kind.lower()
    except Exception:
        kind = ""
    if "v7" in kind:
        # 2 TensorCores/chip; 64 MiB physical VMEM per TC -> modest scoped bump.
        return 2, 8192, 48 * 1024 * 1024
    if "v6" in kind:
        # 1 TC, 128 MiB VMEM (32 MiB scoped default) -> bigger blocks, raise limit.
        return 1, 8192, 64 * 1024 * 1024
    if "v5" in kind:
        # v5e: 1 TC, 128 MiB VMEM but 16 MiB scoped default -> raise limit.
        return 1, 4096, 64 * 1024 * 1024
    # Unknown chip: conservative defaults, leave scoped VMEM limit alone.
    return 1, 4096, None


def _rmse_partial_kernel(pred_ref, true_ref, out_ref, *,
                         tile_rows, lanes, rows_total, tiles_per_core,
                         mask_needed):
    c = pl.program_id(0)
    i = pl.program_id(1)

    @pl.when(i == 0)
    def _():
        out_ref[...] = jnp.zeros_like(out_ref)

    def fold(apply_mask):
        diff = pred_ref[...].astype(jnp.float32) - true_ref[...].astype(jnp.float32)
        if apply_mask:
            # Row-level mask only (single iota along dim 0 vs. valid row count):
            # rows past the end of the array (padded block rows) and the fully
            # duplicated clamped tiles (valid <= 0) contribute zero.
            t = c * tiles_per_core + i              # unclamped tile index
            valid = rows_total - t * tile_rows      # real rows in this tile
            row_ids = jax.lax.broadcasted_iota(jnp.int32, (tile_rows, lanes), 0)
            diff = jnp.where(row_ids < valid, diff, jnp.float32(0.0))
        sq = diff * diff
        # Fold (tile_rows,128) -> (8,128) with plain VPU adds (no cross-lane XLU).
        return jnp.sum(sq.reshape(tile_rows // 8, 8, lanes), axis=0)

    if not mask_needed:
        out_ref[...] += fold(False)
    else:
        t = c * tiles_per_core + i
        # Edge tiles: the real last tile (partially valid) and any clamped
        # duplicate tiles (fully invalid). Interior tiles stay mask-free.
        is_edge = (t + 1) * tile_rows > rows_total

        @pl.when(jnp.logical_not(is_edge))
        def _():
            out_ref[...] += fold(False)

        @pl.when(is_edge)
        def _():
            out_ref[...] += fold(True)


def rmse_loss(y_pred, y_true, *, lanes=128, tile_rows=None, num_cores=None,
              vmem_limit_bytes=None):
    """sqrt(mean((y_pred - y_true)**2)) over all elements (torch MSELoss default)."""
    assert y_pred.shape == y_true.shape, "shapes must match (no broadcasting)"
    total_n = y_pred.size
    if total_n == 0:
        # torch.nn.MSELoss on an empty input yields nan.
        return jnp.array(jnp.nan, dtype=jnp.float32)

    nc_d, tr_d, vmem_d = _chip_defaults()
    num_cores = nc_d if num_cores is None else int(num_cores)
    tile_rows = tr_d if tile_rows is None else int(tile_rows)
    vmem_limit_bytes = vmem_d if vmem_limit_bytes is None else vmem_limit_bytes

    flat_pred = y_pred.reshape(-1)
    flat_true = y_true.reshape(-1)

    rows = total_n // lanes
    n_aligned = rows * lanes
    rem = total_n - n_aligned

    # <=127-element ragged tail handled in plain JAX (no padded HBM copy of the
    # full inputs).
    tail_ss = jnp.float32(0.0)
    if rem:
        tp = flat_pred[n_aligned:].astype(jnp.float32)
        tt = flat_true[n_aligned:].astype(jnp.float32)
        td = tp - tt
        tail_ss = jnp.sum(td * td)

    if rows == 0:
        return jnp.sqrt(tail_ss / jnp.float32(total_n))

    pred2d = flat_pred[:n_aligned].reshape(rows, lanes)
    true2d = flat_true[:n_aligned].reshape(rows, lanes)

    # Dtype-aware minimum sublane multiple (8 f32 / 16 bf16 / 32 int8).
    itemsize = int(y_pred.dtype.itemsize)
    sublane_mult = max(8, 32 // max(itemsize, 1))
    tile_rows_eff = int(min(tile_rows, _round_up(rows, sublane_mult)))
    tile_rows_eff = _round_up(tile_rows_eff, sublane_mult)

    num_tiles = pl.cdiv(rows, tile_rows_eff)
    nc = max(1, int(num_cores))
    tiles_per_core = pl.cdiv(num_tiles, nc)
    # Row-coverage check (lane-pad is handled by the tail path above): mask is
    # only needed when block rows extend past `rows` or tiles are duplicated.
    mask_needed = (nc * tiles_per_core * tile_rows_eff) != rows

    def in_index_map(c, i):
        # Clamp so a duplicated trailing tile never DMAs past the array end;
        # its contribution is zeroed by the in-kernel row mask.
        t = c * tiles_per_core + i
        return (jnp.minimum(t, num_tiles - 1), 0)

    kernel = functools.partial(
        _rmse_partial_kernel,
        tile_rows=tile_rows_eff,
        lanes=lanes,
        rows_total=rows,
        tiles_per_core=tiles_per_core,
        mask_needed=mask_needed,
    )

    cost = pl.CostEstimate(
        flops=3 * total_n,
        transcendentals=0,
        bytes_accessed=2 * n_aligned * itemsize + nc * 8 * lanes * 4,
    )

    compiler_kwargs = dict(dimension_semantics=("parallel", "arbitrary"))
    if vmem_limit_bytes is not None:
        compiler_kwargs["vmem_limit_bytes"] = int(vmem_limit_bytes)

    partials = pl.pallas_call(
        kernel,
        out_shape=jax.ShapeDtypeStruct((nc * 8, lanes), jnp.float32),
        grid_spec=pltpu.PrefetchScalarGridSpec(
            num_scalar_prefetch=0,
            grid=(nc, tiles_per_core),
            in_specs=[
                pl.BlockSpec((tile_rows_eff, lanes), in_index_map),
                pl.BlockSpec((tile_rows_eff, lanes), in_index_map),
            ],
            out_specs=pl.BlockSpec((8, lanes), lambda c, i: (c, 0)),
        ),
        compiler_params=pltpu.CompilerParams(**compiler_kwargs),
        cost_estimate=cost,
    )(pred2d, true2d)

    # Final tree reduce + sqrt(mean) in plain JAX (tiny).
    return jnp.sqrt((jnp.sum(partials) + tail_ss) / jnp.float32(total_n))


if __name__ == "__main__":
    key = jax.random.PRNGKey(0)
    k1, k2 = jax.random.split(key)

    # NCHW-style shapes (batch=2, channels=4, spatial=16x16) -> 2048 elements.
    y_pred = jax.random.normal(k1, (2, 4, 16, 16), dtype=jnp.float32)
    y_true = jax.random.normal(k2, (2, 4, 16, 16), dtype=jnp.float32)
    rmse = jax.block_until_ready(rmse_loss(y_pred, y_true))
    ref = jnp.sqrt(jnp.mean((y_pred - y_true) ** 2))
    assert jnp.allclose(rmse, ref, rtol=1e-5, atol=1e-6), (rmse, ref)

    # Ragged (non-128-multiple) case: 1155 elements -> 9 aligned rows + 3 tail.
    k3, k4 = jax.random.split(k2)
    a = jax.random.normal(k3, (3, 5, 7, 11), dtype=jnp.float32)
    b = jax.random.normal(k4, (3, 5, 7, 11), dtype=jnp.float32)
    out2 = jax.block_until_ready(rmse_loss(a, b))
    ref2 = jnp.sqrt(jnp.mean((a - b) ** 2))
    assert jnp.allclose(out2, ref2, rtol=1e-5, atol=1e-6), (out2, ref2)

    # bf16 case (dtype-aware sublane rounding path).
    k5, k6 = jax.random.split(k4)
    p16 = jax.random.normal(k5, (4, 64, 64), dtype=jnp.float32).astype(jnp.bfloat16)
    t16 = jax.random.normal(k6, (4, 64, 64), dtype=jnp.float32).astype(jnp.bfloat16)
    out3 = jax.block_until_ready(rmse_loss(p16, t16))
    ref3 = jnp.sqrt(jnp.mean(
        (p16.astype(jnp.float32) - t16.astype(jnp.float32)) ** 2))
    assert jnp.allclose(out3, ref3, rtol=1e-4, atol=1e-5), (out3, ref3)

    print("KERNEL_OK")
</pallas_src>

<mosaic_0001>
module attributes {stable_mosaic.version = 11 : i64} {
  func.func @_rmse_partial_kernel(%arg0: i32, %arg1: i32, %arg2: memref<16x128xf32, #tpu.memory_space<vmem>>, %arg3: memref<16x128xf32, #tpu.memory_space<vmem>>, %arg4: memref<8x128xf32, #tpu.memory_space<vmem>>) attributes {dimension_semantics = [#tpu.dimension_semantics<parallel>, #tpu.dimension_semantics<arbitrary>], iteration_bounds = array<i64: 1, 1>, scalar_prefetch = 0 : i64, scratch_operands = 0 : i64, tpu.core_type = #tpu.core_type<tc>, window_params = [{transform_indices = @transform_0, window_bounds = array<i64: 16, 128>}, {transform_indices = @transform_1, window_bounds = array<i64: 16, 128>}, {transform_indices = @transform_2, window_bounds = array<i64: 8, 128>}]} {
    %c0_i32 = arith.constant 0 : i32
    %0 = arith.cmpi eq, %arg1, %c0_i32 : i32
    %1 = arith.extui %0 : i1 to i32
    %c0_i32_0 = arith.constant 0 : i32
    %2 = arith.cmpi ne, %1, %c0_i32_0 : i32
    scf.if %2 {
      %cst_8 = arith.constant 0.000000e+00 : f32
      %12 = vector.broadcast %cst_8 : f32 to vector<8x128xf32>
      %c0_9 = arith.constant 0 : index
      %c0_10 = arith.constant 0 : index
      %13 = vector.load %arg4[%c0_9, %c0_10] : memref<8x128xf32, #tpu.memory_space<vmem>>, vector<8x128xf32>
      tpu.vector_store %arg4[%c0_9, %c0_10], %12 {strides = array<i32>} : memref<8x128xf32, #tpu.memory_space<vmem>>, vector<8x128xf32>,
    } else {
    }
    %c0 = arith.constant 0 : index
    %c0_1 = arith.constant 0 : index
    %3 = vector.load %arg4[%c0, %c0_1] : memref<8x128xf32, #tpu.memory_space<vmem>>, vector<8x128xf32>
    %c0_2 = arith.constant 0 : index
    %c0_3 = arith.constant 0 : index
    %4 = vector.load %arg2[%c0_2, %c0_3] : memref<16x128xf32, #tpu.memory_space<vmem>>, vector<16x128xf32>
    %c0_4 = arith.constant 0 : index
    %c0_5 = arith.constant 0 : index
    %5 = vector.load %arg3[%c0_4, %c0_5] : memref<16x128xf32, #tpu.memory_space<vmem>>, vector<16x128xf32>
    %6 = arith.subf %4, %5 : vector<16x128xf32>
    %7 = arith.mulf %6, %6 : vector<16x128xf32>
    %8 = vector.shape_cast %7 : vector<16x128xf32> to vector<2x8x128xf32>
    %cst = arith.constant dense<0.000000e+00> : vector<8x128xf32>
    %9 = vector.multi_reduction <add>, %8, %cst [0] : vector<2x8x128xf32> to vector<8x128xf32>
    %10 = arith.addf %3, %9 : vector<8x128xf32>
    %c0_6 = arith.constant 0 : index
    %c0_7 = arith.constant 0 : index
    %11 = vector.load %arg4[%c0_6, %c0_7] : memref<8x128xf32, #tpu.memory_space<vmem>>, vector<8x128xf32>
    tpu.vector_store %arg4[%c0_6, %c0_7], %10 {strides = array<i32>} : memref<8x128xf32, #tpu.memory_space<vmem>>, vector<8x128xf32>,
    return
  }
  func.func @transform_0(%arg0: i32, %arg1: i32) -> (i32, i32) {
    %c1_i32 = arith.constant 1 : i32
    %0 = arith.muli %arg0, %c1_i32 : i32
    %1 = arith.addi %0, %arg1 : i32
    %c0_i32 = arith.constant 0 : i32
    %2 = arith.minsi %1, %c0_i32 : i32
    %c0_i32_0 = arith.constant 0 : i32
    %c0_i32_1 = arith.constant 0 : i32
    return %2, %c0_i32_0 : i32, i32
  }
  func.func @transform_1(%arg0: i32, %arg1: i32) -> (i32, i32) {
    %c1_i32 = arith.constant 1 : i32
    %0 = arith.muli %arg0, %c1_i32 : i32
    %1 = arith.addi %0, %arg1 : i32
    %c0_i32 = arith.constant 0 : i32
    %2 = arith.minsi %1, %c0_i32 : i32
    %c0_i32_0 = arith.constant 0 : i32
    %c0_i32_1 = arith.constant 0 : i32
    return %2, %c0_i32_0 : i32, i32
  }
  func.func @transform_2(%arg0: i32, %arg1: i32) -> (i32, i32) {
    %c0_i32 = arith.constant 0 : i32
    %c0_i32_0 = arith.constant 0 : i32
    return %arg0, %c0_i32 : i32, i32
  }
}

</mosaic_0001>

<llo_original>
// kernel: tpu_custom_call.1
$region0: #{tpu_custom_call.1}
  #allocation0 [shape = 'u32[]', space=smem, size = 0x4, offset = 0x4, fixed_abs, tag = 'smem constant byte address 0x4 - core index']
  #allocation1 [shape = 'u32[144,128]{1,0:T(1,128)}', space=vmem, size = 0x12000, scoped, tag = 'internal scratch']
  %s0 = inlined_call_operand.hbm [shape: f32[16,128], index: 0, kind: input, shape index: {}]
  %s1 = inlined_call_operand.hbm [shape: f32[16,128], index: 1, kind: input, shape index: {}]
  %s2 = inlined_call_operand.hbm [shape: f32[8,128], index: 2, kind: output, shape index: {}]
  %s3 = sld [smem:[#allocation0]]
  $region30: #{tpu_custom_call.1} parent=0
    _
  %s5 = ssub.s32 1, %s3
  %s6 = scalar_select 0, %s5, %s3
  $region1: #{tpu_custom_call.1} parent=0
    #allocation2 [shape = 'u8[8192]{0}', space=vmem, size = 0x2000, scoped, tag = 'input window, operand 0, single buffered']
    #allocation3 [shape = 's32[1]{0}', space=sflag, size = 0x4, scoped, tag = 'scoped memory for tpu_custom_call.1']
    #allocation4 [shape = 's32[1]{0}', space=sflag, size = 0x4, scoped, tag = 'scoped memory for tpu_custom_call.1']
    #allocation5 [shape = 'u8[8192]{0}', space=vmem, size = 0x2000, scoped, tag = 'input window, operand 1, single buffered']
    #allocation6 [shape = 's32[1]{0}', space=sflag, size = 0x4, scoped, tag = 'scoped memory for tpu_custom_call.1']
    #allocation7 [shape = 'u8[4096]{0}', space=vmem, size = 0x1000, scoped, tag = 'output window, operand 0, single buffered']
    %7 = vsyncpa [#allocation3], 0
    %8 = vsyncpa [#allocation6], 0
    %9 = vsyncpa [#allocation4], 0
    // Predicated region
    $region2: #{tpu_custom_call.1} parent=1 // pred_check
      _
    $region3: #{tpu_custom_call.1} parent=1 // pred_check_branch
      %11 = sbr.rel (0) target = $region5
    $region4: #{tpu_custom_call.1} parent=1 // pred_region
      %s12 = sadd.s32 0, 0
      %p13 = scmp.lt.s32.totalorder %s12, 0
      %s14 = scalar_select %p13, %s12, 0
      %s15 = smul.u32 2, %s14
      %s17 = ssub.s32 256, 256
      %18 = vsyncadd [#allocation3], %s17
      %s19 = smul.addr %s15, 128
      %s20 = scalar_lea.hbm %s0, %s19
      %s21 = sshll.u32 [#allocation2], 4
      %s22 = int_to_ptr.vmem [resolvable:$true] %s21
      %27 = dma.hbm_to_vmem [thread:$0]  %s20, 256, %s22, [#allocation3], 128, 128, 8
    $region5: #{tpu_custom_call.1} parent=1 // pred_fallthru
      _
    // Predicated region
    $region6: #{tpu_custom_call.1} parent=1 // pred_check
      _
    $region7: #{tpu_custom_call.1} parent=1 // pred_check_branch
      %29 = sbr.rel (0) target = $region9
    $region8: #{tpu_custom_call.1} parent=1 // pred_region
      %s30 = sadd.s32 0, 0
      %p31 = scmp.lt.s32.totalorder %s30, 0
      %s32 = scalar_select %p31, %s30, 0
      %s33 = smul.u32 2, %s32
      %s35 = ssub.s32 256, 256
      %36 = vsyncadd [#allocation6], %s35
      %s37 = smul.addr %s33, 128
      %s38 = scalar_lea.hbm %s1, %s37
      %s39 = sshll.u32 [#allocation5], 4
      %s40 = int_to_ptr.vmem [resolvable:$true] %s39
      %45 = dma.hbm_to_vmem [thread:$0]  %s38, 256, %s40, [#allocation6], 128, 128, 8
    $region9: #{tpu_custom_call.1} parent=1 // pred_fallthru
      _
    // Predicated region
    $region10: #{tpu_custom_call.1} parent=1 // pred_check
      _
    $region11: #{tpu_custom_call.1} parent=1 // pred_check_branch
      %47 = sbr.rel (0) target = $region13
    $region12: #{tpu_custom_call.1} parent=1 // pred_region
      %48 = dma.done [#allocation3], 256
    $region13: #{tpu_custom_call.1} parent=1 // pred_fallthru
      _
    // Predicated region
    $region14: #{tpu_custom_call.1} parent=1 // pred_check
      _
    $region15: #{tpu_custom_call.1} parent=1 // pred_check_branch
      %50 = sbr.rel (0) target = $region17
    $region16: #{tpu_custom_call.1} parent=1 // pred_region
      %51 = dma.done [#allocation6], 256
    $region17: #{tpu_custom_call.1} parent=1 // pred_fallthru
      _
    %s52 = sadd.s32 0, 0
    %p53 = scmp.lt.s32.totalorder %s52, 0
    %s54 = scalar_select %p53, %s52, 0
    %s55 = smul.u32 2, %s54
    %s56 = sadd.s32 0, 0
    %p57 = scmp.lt.s32.totalorder %s56, 0
    %s58 = scalar_select %p57, %s56, 0
    %s59 = smul.u32 2, %s58
    %p60 = scmp.eq.s32.totalorder 0, 0
    // Predicated region
    $region18: #{tpu_custom_call.1} parent=1 // pred_check
      %p61 = pneg %p60
    $region19: #{tpu_custom_call.1} parent=1 // pred_check_branch
      %63 = sbr.rel (%p61) target = $region21
    $region20: #{tpu_custom_call.1} parent=1 // pred_region
      %64 = vst [vmem:[#allocation7] sm:$0xff] 0.0
    $region21: #{tpu_custom_call.1} parent=1 // pred_fallthru
      _
    %v65 = vld [vmem:[#allocation7] sm:$0xff]
    %v66 = vld [vmem:[#allocation2] sm:$0xff]
    %v67 = vld [vmem:[#allocation2 + $0x8] sm:$0xff]
    %v68 = vld [vmem:[#allocation5] sm:$0xff]
    %v69 = vld [vmem:[#allocation5 + $0x8] sm:$0xff]
    %v70 = vsub.f32 %v66, %v68
    %v71 = vsub.f32 %v67, %v69
    %v72 = vmul.f32 %v70, %v70
    %v73 = vmul.f32 %v71, %v71
    %v74 = vadd.f32 %v72, %v73
    %v75 = vadd.f32 %v65, %v74
    %76 = vst [vmem:[#allocation7] sm:$0xff] %v75
    // Predicated region
    $region22: #{tpu_custom_call.1} parent=1 // pred_check
      _
    $region23: #{tpu_custom_call.1} parent=1 // pred_check_branch
      %78 = sbr.rel (0) target = $region25
    $region24: #{tpu_custom_call.1} parent=1 // pred_region
      %s80 = ssub.s32 128, 128
      %81 = vsyncadd [#allocation4], %s80
      %s83 = sshll.u32 [#allocation7], 4
      %s84 = int_to_ptr.vmem [resolvable:$true] %s83
      %86 = dma.vmem_to_hbm [thread:$0]  %s84, 128, %s2, [#allocation4]
    $region25: #{tpu_custom_call.1} parent=1 // pred_fallthru
      _
    // Predicated region
    $region26: #{tpu_custom_call.1} parent=1 // pred_check
      _
    $region27: #{tpu_custom_call.1} parent=1 // pred_check_branch
      %88 = sbr.rel (0) target = $region29
    $region28: #{tpu_custom_call.1} parent=1 // pred_region
      %89 = dma.done [#allocation4], 128
    $region29: #{tpu_custom_call.1} parent=1 // pred_fallthru
      _
    %90 = vsyncpa [#allocation3], 1
    %91 = vsyncpa [#allocation6], 1
    %92 = vsyncpa [#allocation4], 1

</llo_original>
